<compile_context>
chip_gen: v7x
topology: tpu7x:2x2x1
jax: 0.10.0
libtpu: 0.0.40
codegen_flags: <defaults>
</compile_context>

<pallas_src>
import functools

import jax
import jax.numpy as jnp
from jax.experimental import pallas as pl
from jax.experimental.pallas import tpu as pltpu

_LANE = 128
_MIB = 1 << 20


def _round_up(v, m):
    return ((v + m - 1) // m) * m


def _sublane_rows(dtype):
    """Minimum sublane multiple for a dtype (sub-32-bit dtypes pack along sublanes)."""
    return {4: 8, 2: 16, 1: 32}.get(jnp.dtype(dtype).itemsize, 8)


# ----------------------------------------------------------------------------- kernels
def _tanh_key_kernel(x_ref, w_ref, b_ref, out_ref):
    """Binary key, tanh path.  tanh is strictly sign-preserving, so
    (tanh(z) > 0) == (z > 0) — the transcendental is intentionally omitted."""
    proj = jnp.dot(x_ref[...], w_ref[...], preferred_element_type=jnp.float32)
    z = proj + b_ref[...].astype(jnp.float32)      # (1, tn) bias broadcasts over rows
    out_ref[...] = (z > 0.0).astype(out_ref.dtype)


def _sine_key_kernel(x_ref, w_ref, out_ref, *, sensitivity):
    """Binary key, sine path: (sin(k * xW) > 0).  sin occupies the EUP slot, which is
    separate from the vld/vst slots, so it is hidden under the output store."""
    proj = jnp.dot(x_ref[...], w_ref[...], preferred_element_type=jnp.float32)
    out_ref[...] = (jnp.sin(sensitivity * proj) > 0.0).astype(out_ref.dtype)


# ----------------------------------------------------------------------------- wrapper
class PallasKeyMapper:
    """Pallas-backed KeyMapper.forward.

    Static parameters (W, b) are lane-padded / cast exactly once here, so the per-call
    wrapper does no parameter HBM passes.
    """

    _VMEM_TILE_BUDGET = 36 * _MIB    # tile working-set target
    _W_TILE_CAP = 8 * _MIB           # max bytes for one (K, tn) W tile
    _VMEM_LIMIT = 48 * _MIB          # scoped-VMEM cap; headroom under v7x's 64 MiB

    def __init__(self, W, b=None, *, use_sine=False, sensitivity=10.0,
                 block_rows=512, compute_dtype=None, out_dtype=jnp.float32):
        K, N = W.shape
        self.input_dim = K
        self.output_dim = N
        self.use_sine = bool(use_sine)
        self.sensitivity = float(sensitivity)
        self.block_rows = int(block_rows)
        self.out_dtype = jnp.dtype(out_dtype)    # narrower key dtypes (int8/bf16) OK too
        self.compute_dtype = None if compute_dtype is None else jnp.dtype(compute_dtype)
        self._single_buffer_ok = None            # cache for the pl.Buffered(1) fallback

        # Lane-dense padding of the key/N dimension (done once; sliced off per call
        # only if N is not already a multiple of 128).
        n_pad = _round_up(max(N, _LANE), _LANE)
        self.n_pad = n_pad

        w = jnp.asarray(W)
        if self.compute_dtype is not None:
            w = w.astype(self.compute_dtype)
        if n_pad != N:
            w = jnp.pad(w, ((0, 0), (0, n_pad - N)))
        self.w = w                                # (K, n_pad)

        if self.use_sine:
            self.b = None                         # bias unused -> never DMA'd
        else:
            if b is None:
                raise ValueError("bias b is required when use_sine=False")
            bb = jnp.asarray(b).astype(jnp.float32).reshape(1, N)
            if n_pad != N:
                bb = jnp.pad(bb, ((0, 0), (0, n_pad - N)))
            self.b = bb                           # (1, n_pad) float32

    def __call__(self, x):
        B, K = x.shape
        if K != self.input_dim:
            raise ValueError(f"expected input_dim={self.input_dim}, got {K}")
        if self.compute_dtype is not None and x.dtype != self.compute_dtype:
            x = x.astype(self.compute_dtype)      # e.g. bf16: halves the x HBM stream

        N, n_pad = self.output_dim, self.n_pad
        xbytes = jnp.dtype(x.dtype).itemsize
        wbytes = jnp.dtype(self.w.dtype).itemsize
        obytes = self.out_dtype.itemsize
        sub = max(_sublane_rows(x.dtype), _sublane_rows(self.out_dtype))

        # ---- row tile -----------------------------------------------------------
        tb = min(_round_up(self.block_rows, sub), _round_up(B, sub))

        # ---- N tile: largest multiple-of-128 divisor of n_pad under caps.
        # If the row grid would have a single step (small batch) and the key is wide,
        # cap tn so the N axis gets >= 2 blocks and both v7x TensorCores have work.
        cap_cols = 2048
        if pl.cdiv(B, tb) == 1 and n_pad >= 2 * _LANE:
            cap_cols = min(cap_cols, n_pad // 2)
        m = n_pad // _LANE
        tn = _LANE
        for d in range(1, m + 1):
            if m % d:
                continue
            cand = d * _LANE
            if cand > cap_cols or K * cand * wbytes > self._W_TILE_CAP:
                break
            tn = cand
        grid_n = n_pad // tn
        w_single = grid_n == 1                    # W / b grid-invariant

        # ---- keep the VMEM working set under budget -------------------------------
        def vmem_est(tb_):
            w_bufs = 1 if w_single else 2
            return (2 * tb_ * K * xbytes           # x (double-buffered)
                    + w_bufs * K * tn * wbytes     # W
                    + w_bufs * tn * 4              # bias
                    + 2 * tb_ * tn * obytes)       # output (double-buffered)

        while tb > sub and vmem_est(tb) > self._VMEM_TILE_BUDGET:
            tb = max(sub, _round_up(tb // 2, sub))

        # ---- rows: ragged final block (no full-array padding) --------------------
        if B < tb:
            # Tiny batch only: pad fewer than `sub` rows; negligible and keeps the
            # row block sublane-aligned.
            x_in = jnp.pad(x, ((0, tb - B), (0, 0)))
            rows = tb
        else:
            x_in = x
            rows = B
        grid = (pl.cdiv(rows, tb), grid_n)

        out_shape = jax.ShapeDtypeStruct((rows, n_pad), self.out_dtype)
        cparams = pltpu.CompilerParams(
            dimension_semantics=("parallel", "parallel"),
            vmem_limit_bytes=int(min(self._VMEM_LIMIT,
                                     max(32 * _MIB, 2 * vmem_est(tb)))))

        def run(single_buffer):
            def param_spec(shape):
                if single_buffer:
                    # Grid-invariant operand: one VMEM buffer is enough.
                    return pl.BlockSpec(shape, lambda i, j: (0, j),
                                        pipeline_mode=pl.Buffered(1))
                return pl.BlockSpec(shape, lambda i, j: (0, j))

            x_spec = pl.BlockSpec((tb, K), lambda i, j: (i, 0))
            w_spec = param_spec((K, tn))
            out_spec = pl.BlockSpec((tb, tn), lambda i, j: (i, j))

            if self.use_sine:
                kernel = functools.partial(_sine_key_kernel,
                                           sensitivity=self.sensitivity)
                return pl.pallas_call(
                    kernel, out_shape=out_shape, grid=grid,
                    in_specs=[x_spec, w_spec], out_specs=out_spec,
                    compiler_params=cparams)(x_in, self.w)

            b_spec = param_spec((1, tn))
            return pl.pallas_call(
                _tanh_key_kernel, out_shape=out_shape, grid=grid,
                in_specs=[x_spec, w_spec, b_spec], out_specs=out_spec,
                compiler_params=cparams)(x_in, self.w, self.b)

        if w_single and self._single_buffer_ok is not False:
            try:
                out = run(True)
                self._single_buffer_ok = True
            except Exception:    # pl.Buffered(1) unsupported on this jax/libtpu combo
                self._single_buffer_ok = False
                out = run(False)
        else:
            out = run(False)

        # Slice only when actually needed (lane padding of the key dim / padded rows).
        if rows != B:
            out = out[:B]
        if n_pad != N:
            out = out[:, :N]
        return out


def key_mapper_forward(x, W, b=None, *, use_sine=False, sensitivity=10.0, **kwargs):
    """One-shot functional form (pads W/b on every call; prefer PallasKeyMapper)."""
    return PallasKeyMapper(W, b, use_sine=use_sine, sensitivity=sensitivity, **kwargs)(x)


# ----------------------------------------------------------------------------- testing
def key_mapper_reference(x, W, b=None, *, use_sine=False, sensitivity=10.0):
    """Pure-JAX reference mirroring the PyTorch forward (with the tanh/sin)."""
    proj = jnp.matmul(x.astype(jnp.float32), W.astype(jnp.float32))
    if use_sine:
        act = jnp.sin(sensitivity * proj)
    else:
        act = jnp.tanh(proj + b.astype(jnp.float32))
    return (act > 0).astype(jnp.float32)


def _bits_agree(out, ref, pre_sign, tol=1e-4):
    """Bits may only legitimately disagree where the pre-sign value is ~0
    (different accumulation order / transcendental lowering)."""
    mism = out.astype(jnp.float32) != ref
    return bool(jnp.all(~mism | (jnp.abs(pre_sign) < tol)))


if __name__ == "__main__":
    input_dim, output_dim, batch = 32, 4, 2

    key = jax.random.PRNGKey(0)
    k_w, k_b, k_x, k_xl = jax.random.split(key, 4)
    W = jax.random.normal(k_w, (input_dim, output_dim), dtype=jnp.float32)
    b = jax.random.normal(k_b, (output_dim,), dtype=jnp.float32)
    x = jax.random.normal(k_x, (batch, input_dim), dtype=jnp.float32)

    # --- tanh(+bias) path, tiny batch (exercises single-buffered W/b) ------------
    mapper = PallasKeyMapper(W, b, use_sine=False)
    out = jax.block_until_ready(mapper(x))
    ref = key_mapper_reference(x, W, b, use_sine=False)
    assert out.shape == (batch, output_dim) and out.dtype == jnp.float32
    assert _bits_agree(out, ref, jnp.matmul(x, W) + b)

    # --- sine path, tiny batch (bias never DMA'd) ---------------------------------
    mapper_sin = PallasKeyMapper(W, use_sine=True, sensitivity=10.0)
    out_s = jax.block_until_ready(mapper_sin(x))
    ref_s = key_mapper_reference(x, W, b, use_sine=True, sensitivity=10.0)
    assert _bits_agree(out_s, ref_s, jnp.sin(10.0 * jnp.matmul(x, W)))

    # --- larger batch: ragged final row block, no x padding / row slicing ---------
    x_l = jax.random.normal(k_xl, (600, input_dim), dtype=jnp.float32)
    out_l = jax.block_until_ready(mapper(x_l))
    ref_l = key_mapper_reference(x_l, W, b, use_sine=False)
    assert out_l.shape == (600, output_dim)
    assert _bits_agree(out_l, ref_l, jnp.matmul(x_l, W) + b)

    # --- bf16 compute path (W pre-cast once, x cast at the call boundary) ---------
    mapper_bf16 = PallasKeyMapper(W, b, compute_dtype=jnp.bfloat16)
    out_bf = jax.block_until_ready(mapper_bf16(x_l))
    pre_bf = jnp.matmul(x_l.astype(jnp.bfloat16).astype(jnp.float32),
                        W.astype(jnp.bfloat16).astype(jnp.float32)) + b
    ref_bf = (pre_bf > 0).astype(jnp.float32)
    assert _bits_agree(out_bf, ref_bf, pre_bf, tol=1e-3)

    print("KERNEL_OK")
</pallas_src>

<mosaic_0001>
module attributes {stable_mosaic.version = 11 : i64} {
  func.func @_tanh_key_kernel(%arg0: i32, %arg1: i32, %arg2: memref<8x32xf32, #tpu.memory_space<vmem>>, %arg3: memref<32x128xf32, #tpu.memory_space<vmem>>, %arg4: memref<1x128xf32, #tpu.memory_space<vmem>>, %arg5: memref<8x128xf32, #tpu.memory_space<vmem>>) attributes {dimension_semantics = [#tpu.dimension_semantics<parallel>, #tpu.dimension_semantics<parallel>], iteration_bounds = array<i64: 1, 1>, scalar_prefetch = 0 : i64, scratch_operands = 0 : i64, tpu.core_type = #tpu.core_type<tc>, window_params = [{transform_indices = @transform_0, window_bounds = array<i64: 8, 32>}, {pipeline_mode = #tpu.pipeline_mode<synchronous>, transform_indices = @transform_1, window_bounds = array<i64: 32, 128>}, {pipeline_mode = #tpu.pipeline_mode<synchronous>, transform_indices = @transform_2, window_bounds = array<i64: 1, 128>}, {transform_indices = @transform_3, window_bounds = array<i64: 8, 128>}]} {
    %c0 = arith.constant 0 : index
    %c0_0 = arith.constant 0 : index
    %0 = vector.load %arg2[%c0, %c0_0] : memref<8x32xf32, #tpu.memory_space<vmem>>, vector<8x32xf32>
    %c0_1 = arith.constant 0 : index
    %c0_2 = arith.constant 0 : index
    %1 = vector.load %arg3[%c0_1, %c0_2] : memref<32x128xf32, #tpu.memory_space<vmem>>, vector<32x128xf32>
    %cst = arith.constant dense<0.000000e+00> : vector<8x128xf32>
    %2 = tpu.matmul %0, %1, %cst {dimension_numbers = #tpu.dot_dimension_numbers<[1], [0], [0], [1], [0, 0, 1, 1], [], []>} : vector<8x32xf32>, vector<32x128xf32>, vector<8x128xf32> -> vector<8x128xf32>
    %c0_3 = arith.constant 0 : index
    %c0_4 = arith.constant 0 : index
    %3 = vector.load %arg4[%c0_3, %c0_4] : memref<1x128xf32, #tpu.memory_space<vmem>>, vector<1x128xf32>
    %4 = vector.broadcast %3 : vector<1x128xf32> to vector<8x128xf32>
    %5 = arith.addf %2, %4 : vector<8x128xf32>
    %cst_5 = arith.constant 0.000000e+00 : f32
    %6 = vector.broadcast %cst_5 : f32 to vector<8x128xf32>
    %7 = arith.cmpf ogt, %5, %6 : vector<8x128xf32>
    %8 = arith.extui %7 : vector<8x128xi1> to vector<8x128xi32>
    %9 = arith.sitofp %8 : vector<8x128xi32> to vector<8x128xf32>
    %c0_6 = arith.constant 0 : index
    %c0_7 = arith.constant 0 : index
    %10 = vector.load %arg5[%c0_6, %c0_7] : memref<8x128xf32, #tpu.memory_space<vmem>>, vector<8x128xf32>
    tpu.vector_store %arg5[%c0_6, %c0_7], %9 {strides = array<i32>} : memref<8x128xf32, #tpu.memory_space<vmem>>, vector<8x128xf32>,
    return
  }
  func.func @transform_0(%arg0: i32, %arg1: i32) -> (i32, i32) {
    %c0_i32 = arith.constant 0 : i32
    %c0_i32_0 = arith.constant 0 : i32
    return %arg0, %c0_i32 : i32, i32
  }
  func.func @transform_1(%arg0: i32, %arg1: i32) -> (i32, i32) {
    %c0_i32 = arith.constant 0 : i32
    %c0_i32_0 = arith.constant 0 : i32
    return %c0_i32, %arg1 : i32, i32
  }
  func.func @transform_2(%arg0: i32, %arg1: i32) -> (i32, i32) {
    %c0_i32 = arith.constant 0 : i32
    %c0_i32_0 = arith.constant 0 : i32
    return %c0_i32, %arg1 : i32, i32
  }
  func.func @transform_3(%arg0: i32, %arg1: i32) -> (i32, i32) {
    %c0_i32 = arith.constant 0 : i32
    return %arg0, %arg1 : i32, i32
  }
}

module attributes {stable_mosaic.version = 11 : i64} {
  func.func @_tanh_key_kernel(%arg0: i32, %arg1: i32, %arg2: memref<8x32xf32, #tpu.memory_space<vmem>>, %arg3: memref<32x128xf32, #tpu.memory_space<vmem>>, %arg4: memref<1x128xf32, #tpu.memory_space<vmem>>, %arg5: memref<8x128xf32, #tpu.memory_space<vmem>>) attributes {dimension_semantics = [#tpu.dimension_semantics<parallel>, #tpu.dimension_semantics<parallel>], iteration_bounds = array<i64: 1, 1>, scalar_prefetch = 0 : i64, scratch_operands = 0 : i64, tpu.core_type = #tpu.core_type<tc>, window_params = [{transform_indices = @transform_0, window_bounds = array<i64: 8, 32>}, {transform_indices = @transform_1, window_bounds = array<i64: 32, 128>}, {transform_indices = @transform_2, window_bounds = array<i64: 1, 128>}, {transform_indices = @transform_3, window_bounds = array<i64: 8, 128>}]} {
    %c0 = arith.constant 0 : index
    %c0_0 = arith.constant 0 : index
    %0 = vector.load %arg2[%c0, %c0_0] : memref<8x32xf32, #tpu.memory_space<vmem>>, vector<8x32xf32>
    %c0_1 = arith.constant 0 : index
    %c0_2 = arith.constant 0 : index
    %1 = vector.load %arg3[%c0_1, %c0_2] : memref<32x128xf32, #tpu.memory_space<vmem>>, vector<32x128xf32>
    %cst = arith.constant dense<0.000000e+00> : vector<8x128xf32>
    %2 = tpu.matmul %0, %1, %cst {dimension_numbers = #tpu.dot_dimension_numbers<[1], [0], [0], [1], [0, 0, 1, 1], [], []>} : vector<8x32xf32>, vector<32x128xf32>, vector<8x128xf32> -> vector<8x128xf32>
    %c0_3 = arith.constant 0 : index
    %c0_4 = arith.constant 0 : index
    %3 = vector.load %arg4[%c0_3, %c0_4] : memref<1x128xf32, #tpu.memory_space<vmem>>, vector<1x128xf32>
    %4 = vector.broadcast %3 : vector<1x128xf32> to vector<8x128xf32>
    %5 = arith.addf %2, %4 : vector<8x128xf32>
    %cst_5 = arith.constant 0.000000e+00 : f32
    %6 = vector.broadcast %cst_5 : f32 to vector<8x128xf32>
    %7 = arith.cmpf ogt, %5, %6 : vector<8x128xf32>
    %8 = arith.extui %7 : vector<8x128xi1> to vector<8x128xi32>
    %9 = arith.sitofp %8 : vector<8x128xi32> to vector<8x128xf32>
    %c0_6 = arith.constant 0 : index
    %c0_7 = arith.constant 0 : index
    %10 = vector.load %arg5[%c0_6, %c0_7] : memref<8x128xf32, #tpu.memory_space<vmem>>, vector<8x128xf32>
    tpu.vector_store %arg5[%c0_6, %c0_7], %9 {strides = array<i32>} : memref<8x128xf32, #tpu.memory_space<vmem>>, vector<8x128xf32>,
    return
  }
  func.func @transform_0(%arg0: i32, %arg1: i32) -> (i32, i32) {
    %c0_i32 = arith.constant 0 : i32
    %c0_i32_0 = arith.constant 0 : i32
    return %arg0, %c0_i32 : i32, i32
  }
  func.func @transform_1(%arg0: i32, %arg1: i32) -> (i32, i32) {
    %c0_i32 = arith.constant 0 : i32
    %c0_i32_0 = arith.constant 0 : i32
    return %c0_i32, %arg1 : i32, i32
  }
  func.func @transform_2(%arg0: i32, %arg1: i32) -> (i32, i32) {
    %c0_i32 = arith.constant 0 : i32
    %c0_i32_0 = arith.constant 0 : i32
    return %c0_i32, %arg1 : i32, i32
  }
  func.func @transform_3(%arg0: i32, %arg1: i32) -> (i32, i32) {
    %c0_i32 = arith.constant 0 : i32
    return %arg0, %arg1 : i32, i32
  }
}

</mosaic_0001>

<llo_original>
// kernel: tpu_custom_call.1
$region0: #{tpu_custom_call.1}
  #allocation0 [shape = 'u32[]', space=smem, size = 0x4, offset = 0x4, fixed_abs, tag = 'smem constant byte address 0x4 - core index']
  #allocation1 [shape = 'u32[144,128]{1,0:T(1,128)}', space=vmem, size = 0x12000, scoped, tag = 'internal scratch']
  %s0 = inlined_call_operand.hbm [shape: f32[8,32], index: 0, kind: input, shape index: {}]
  %s1 = inlined_call_operand.hbm [shape: f32[32,128], index: 1, kind: input, shape index: {}]
  %s2 = inlined_call_operand.vmem [shape: f32[1,128], index: 2, kind: input, shape index: {}]
  %s3 = inlined_call_operand.hbm [shape: f32[8,128], index: 3, kind: output, shape index: {}]
  %s4 = sld [smem:[#allocation0]]
  $region30: #{tpu_custom_call.1} parent=0
    _
  %s6 = ssub.s32 1, %s4
  %s7 = scalar_select 0, %s6, %s4
  $region1: #{tpu_custom_call.1} parent=0
    #allocation2 [shape = 'u8[4096]{0}', space=vmem, size = 0x1000, scoped, tag = 'input window, operand 0, single buffered']
    #allocation3 [shape = 's32[1]{0}', space=sflag, size = 0x4, scoped, tag = 'scoped memory for tpu_custom_call.1']
    #allocation4 [shape = 's32[1]{0}', space=sflag, size = 0x4, scoped, tag = 'scoped memory for tpu_custom_call.1']
    #allocation5 [shape = 'u8[16384]{0}', space=vmem, size = 0x4000, scoped, tag = 'input window, operand 1, single buffered']
    #allocation6 [shape = 's32[1]{0}', space=sflag, size = 0x4, scoped, tag = 'scoped memory for tpu_custom_call.1']
    #allocation7 [shape = 'u8[4096]{0}', space=vmem, size = 0x1000, scoped, tag = 'output window, operand 0, single buffered']
    %8 = vsyncpa [#allocation3], 0
    %9 = vsyncpa [#allocation6], 0
    %10 = vsyncpa [#allocation4], 0
    // Predicated region
    $region2: #{tpu_custom_call.1} parent=1 // pred_check
      _
    $region3: #{tpu_custom_call.1} parent=1 // pred_check_branch
      %12 = sbr.rel (0) target = $region5
    $region4: #{tpu_custom_call.1} parent=1 // pred_region
      %s14 = ssub.s32 128, 128
      %15 = vsyncadd [#allocation3], %s14
      %s17 = sshll.u32 [#allocation2], 4
      %s18 = int_to_ptr.vmem [resolvable:$true] %s17
      %20 = dma.hbm_to_vmem [thread:$0]  %s0, 128, %s18, [#allocation3]
    $region5: #{tpu_custom_call.1} parent=1 // pred_fallthru
      _
    // Predicated region
    $region6: #{tpu_custom_call.1} parent=1 // pred_check
      _
    $region7: #{tpu_custom_call.1} parent=1 // pred_check_branch
      %22 = sbr.rel (0) target = $region9
    $region8: #{tpu_custom_call.1} parent=1 // pred_region
      %s24 = ssub.s32 512, 512
      %25 = vsyncadd [#allocation6], %s24
      %s26 = sshll.u32 [#allocation5], 4
      %s27 = int_to_ptr.vmem [resolvable:$true] %s26
      %32 = dma.hbm_to_vmem [thread:$0]  %s1, 512, %s27, [#allocation6], 128, 128, 8
    $region9: #{tpu_custom_call.1} parent=1 // pred_fallthru
      _
    // Predicated region
    $region10: #{tpu_custom_call.1} parent=1 // pred_check
      _
    $region11: #{tpu_custom_call.1} parent=1 // pred_check_branch
      %34 = sbr.rel (0) target = $region13
    $region12: #{tpu_custom_call.1} parent=1 // pred_region
      _
    $region13: #{tpu_custom_call.1} parent=1 // pred_fallthru
      _
    // Predicated region
    $region14: #{tpu_custom_call.1} parent=1 // pred_check
      _
    $region15: #{tpu_custom_call.1} parent=1 // pred_check_branch
      %36 = sbr.rel (0) target = $region17
    $region16: #{tpu_custom_call.1} parent=1 // pred_region
      %37 = dma.done [#allocation3], 128
    $region17: #{tpu_custom_call.1} parent=1 // pred_fallthru
      _
    // Predicated region
    $region18: #{tpu_custom_call.1} parent=1 // pred_check
      _
    $region19: #{tpu_custom_call.1} parent=1 // pred_check_branch
      %39 = sbr.rel (0) target = $region21
    $region20: #{tpu_custom_call.1} parent=1 // pred_region
      %40 = dma.done [#allocation6], 512
    $region21: #{tpu_custom_call.1} parent=1 // pred_fallthru
      _
    %v41 = vld [vmem:[#allocation2] sm:$0xff]
    %v42 = vld [vmem:[#allocation5] sm:$0xff]
    %v43 = vld [vmem:[#allocation5 + $0x8] sm:$0xff]
    %v44 = vld [vmem:[#allocation5 + $0x10] sm:$0xff]
    %v45 = vld [vmem:[#allocation5 + $0x18] sm:$0xff]
    %v46 = vld [vmem:[%s2] sm:$0x1]
    %v48 = vlaneseq
    %v49 = vshrl.u32 %v48, 7
    %v50 = vsub.s32 0, %v49
    %v51 = vrot.slane %v46, %v50
    %vm53 = vcmask 261120
    %v55 = vsel %vm53, %v41, 0
    %57 = vmatprep.subr.mxu0 0.0
    %58 = vmatpush1.msra.mxu0 %v42
    %59 = vmatprep.subr.mxu0 0.0
    %60 = vmatpush1.msra.mxu0 %v43
    %61 = vmatprep.subr.mxu0 0.0
    %62 = vmatpush1.msra.mxu0 %v44
    %63 = vmatprep.subr.mxu0 0.0
    %64 = vmatpush1.msra.mxu0 %v45
    %65 = vmatprep.subr.mxu0 0.0
    %66 = vmatpush1.msra.mxu0 0.0
    %67 = vmatprep.subr.mxu0 0.0
    %68 = vmatpush1.msra.mxu0 0.0
    %69 = vmatprep.subr.mxu0 0.0
    %70 = vmatpush1.msra.mxu0 0.0
    %71 = vmatprep.subr.mxu0 0.0
    %72 = vmatpush1.msra.mxu0 0.0
    %73 = vmatprep.subr.mxu0 0.0
    %74 = vmatpush1.msra.mxu0 0.0
    %75 = vmatprep.subr.mxu0 0.0
    %76 = vmatpush1.msra.mxu0 0.0
    %77 = vmatprep.subr.mxu0 0.0
    %78 = vmatpush1.msra.mxu0 0.0
    %79 = vmatprep.subr.mxu0 0.0
    %80 = vmatpush1.msra.mxu0 0.0
    %81 = vmatprep.subr.mxu0 0.0
    %82 = vmatpush1.msra.mxu0 0.0
    %83 = vmatprep.subr.mxu0 0.0
    %84 = vmatpush1.msra.mxu0 0.0
    %85 = vmatprep.subr.mxu0 0.0
    %86 = vmatpush1.msra.mxu0 0.0
    %87 = vmatprep.subr.mxu0 0.0
    %88 = vmatpush1.msra.mxu0 0.0
    %89 = vmatprep.subr.mxu0 0.0
    %90 = vmatpush1.msra.mxu0 0.0
    %91 = vmatprep.subr.mxu0 0.0
    %92 = vmatpush1.msra.mxu0 0.0
    %93 = vmatprep.subr.mxu0 0.0
    %94 = vmatpush1.msra.mxu0 0.0
    %95 = vmatprep.subr.mxu0 0.0
    %96 = vmatpush1.msra.mxu0 0.0
    %97 = vmatprep.subr.mxu0 0.0
    %98 = vmatpush1.msra.mxu0 0.0
    %99 = vmatprep.subr.mxu0 0.0
    %100 = vmatpush1.msra.mxu0 0.0
    %101 = vmatprep.subr.mxu0 0.0
    %102 = vmatpush1.msra.mxu0 0.0
    %103 = vmatprep.subr.mxu0 0.0
    %104 = vmatpush1.msra.mxu0 0.0
    %105 = vmatprep.subr.mxu0 0.0
    %106 = vmatpush1.msra.mxu0 0.0
    %107 = vmatprep.subr.mxu0 0.0
    %108 = vmatpush1.msra.mxu0 0.0
    %109 = vmatprep.subr.mxu0 0.0
    %110 = vmatpush1.msra.mxu0 0.0
    %111 = vmatprep.subr.mxu0 0.0
    %112 = vmatpush1.msra.mxu0 0.0
    %113 = vmatprep.subr.mxu0 0.0
    %114 = vmatpush1.msra.mxu0 0.0
    %115 = vmatprep.subr.mxu0 0.0
    %116 = vmatpush1.msra.mxu0 0.0
    %117 = vmatprep.subr.mxu0 0.0
    %118 = vmatpush1.msra.mxu0 0.0
    %119 = vmatprep.subr.mxu0 0.0
    %120 = vmatpush1.msra.mxu0 0.0
    %121 = vmatprep.mubr.f32.mxu0 0.0
    %122 = vmatmul.mubr.f32.gmra.mrb[0].mxu0 %v55
    %v123 = vpop.f32.mrb[0].mxu0
    %v124 = vadd.f32 %v51, %v123
    %v125 = vpop.f32.mrb[0].mxu0
    %126 = vdwg.mxu0
    %vm127 = vcmp.gt.f32.partialorder %v124, 0.0
    %v128 = vsel %vm127, 1, 0
    %v129 = vcvt.s32.f32 %v128
    %130 = vst [vmem:[#allocation7] sm:$0xff] %v129
    // Predicated region
    $region22: #{tpu_custom_call.1} parent=1 // pred_check
      _
    $region23: #{tpu_custom_call.1} parent=1 // pred_check_branch
      %132 = sbr.rel (0) target = $region25
    $region24: #{tpu_custom_call.1} parent=1 // pred_region
      %s134 = ssub.s32 128, 128
      %135 = vsyncadd [#allocation4], %s134
      %s137 = sshll.u32 [#allocation7], 4
      %s138 = int_to_ptr.vmem [resolvable:$true] %s137
      %140 = dma.vmem_to_hbm [thread:$0]  %s138, 128, %s3, [#allocation4]
    $region25: #{tpu_custom_call.1} parent=1 // pred_fallthru
      _
    // Predicated region
    $region26: #{tpu_custom_call.1} parent=1 // pred_check
      _
    $region27: #{tpu_custom_call.1} parent=1 // pred_check_branch
      %142 = sbr.rel (0) target = $region29
    $region28: #{tpu_custom_call.1} parent=1 // pred_region
      %143 = dma.done [#allocation4], 128
    $region29: #{tpu_custom_call.1} parent=1 // pred_fallthru
      _
    %144 = vsyncpa [#allocation3], 1
    %145 = vsyncpa [#allocation6], 1
    %146 = vsyncpa [#allocation4], 1

// kernel: tpu_custom_call.1
$region0: #{tpu_custom_call.1}
  #allocation0 [shape = 'u32[]', space=smem, size = 0x4, offset = 0x4, fixed_abs, tag = 'smem constant byte address 0x4 - core index']
  #allocation1 [shape = 'u32[144,128]{1,0:T(1,128)}', space=vmem, size = 0x12000, scoped, tag = 'internal scratch']
  %s0 = inlined_call_operand.hbm [shape: f32[8,32], index: 0, kind: input, shape index: {}]
  %s1 = inlined_call_operand.hbm [shape: f32[32,128], index: 1, kind: input, shape index: {}]
  %s2 = inlined_call_operand.vmem [shape: f32[1,128], index: 2, kind: input, shape index: {}]
  %s3 = inlined_call_operand.hbm [shape: f32[8,128], index: 3, kind: output, shape index: {}]
  %s4 = sld [smem:[#allocation0]]
  $region30: #{tpu_custom_call.1} parent=0
    _
  %s6 = ssub.s32 1, %s4
  %s7 = scalar_select 0, %s6, %s4
  $region1: #{tpu_custom_call.1} parent=0
    #allocation2 [shape = 'u8[4096]{0}', space=vmem, size = 0x1000, scoped, tag = 'input window, operand 0, single buffered']
    #allocation3 [shape = 's32[1]{0}', space=sflag, size = 0x4, scoped, tag = 'scoped memory for tpu_custom_call.1']
    #allocation4 [shape = 's32[1]{0}', space=sflag, size = 0x4, scoped, tag = 'scoped memory for tpu_custom_call.1']
    #allocation5 [shape = 'u8[16384]{0}', space=vmem, size = 0x4000, scoped, tag = 'input window, operand 1, single buffered']
    #allocation6 [shape = 's32[1]{0}', space=sflag, size = 0x4, scoped, tag = 'scoped memory for tpu_custom_call.1']
    #allocation7 [shape = 'u8[4096]{0}', space=vmem, size = 0x1000, scoped, tag = 'output window, operand 0, single buffered']
    %8 = vsyncpa [#allocation3], 0
    %9 = vsyncpa [#allocation6], 0
    %10 = vsyncpa [#allocation4], 0
    // Predicated region
    $region2: #{tpu_custom_call.1} parent=1 // pred_check
      _
    $region3: #{tpu_custom_call.1} parent=1 // pred_check_branch
      %12 = sbr.rel (0) target = $region5
    $region4: #{tpu_custom_call.1} parent=1 // pred_region
      %s14 = ssub.s32 128, 128
      %15 = vsyncadd [#allocation3], %s14
      %s17 = sshll.u32 [#allocation2], 4
      %s18 = int_to_ptr.vmem [resolvable:$true] %s17
      %20 = dma.hbm_to_vmem [thread:$0]  %s0, 128, %s18, [#allocation3]
    $region5: #{tpu_custom_call.1} parent=1 // pred_fallthru
      _
    // Predicated region
    $region6: #{tpu_custom_call.1} parent=1 // pred_check
      _
    $region7: #{tpu_custom_call.1} parent=1 // pred_check_branch
      %22 = sbr.rel (0) target = $region9
    $region8: #{tpu_custom_call.1} parent=1 // pred_region
      %s24 = ssub.s32 512, 512
      %25 = vsyncadd [#allocation6], %s24
      %s26 = sshll.u32 [#allocation5], 4
      %s27 = int_to_ptr.vmem [resolvable:$true] %s26
      %32 = dma.hbm_to_vmem [thread:$0]  %s1, 512, %s27, [#allocation6], 128, 128, 8
    $region9: #{tpu_custom_call.1} parent=1 // pred_fallthru
      _
    // Predicated region
    $region10: #{tpu_custom_call.1} parent=1 // pred_check
      _
    $region11: #{tpu_custom_call.1} parent=1 // pred_check_branch
      %34 = sbr.rel (0) target = $region13
    $region12: #{tpu_custom_call.1} parent=1 // pred_region
      _
    $region13: #{tpu_custom_call.1} parent=1 // pred_fallthru
      _
    // Predicated region
    $region14: #{tpu_custom_call.1} parent=1 // pred_check
      _
    $region15: #{tpu_custom_call.1} parent=1 // pred_check_branch
      %36 = sbr.rel (0) target = $region17
    $region16: #{tpu_custom_call.1} parent=1 // pred_region
      %37 = dma.done [#allocation3], 128
    $region17: #{tpu_custom_call.1} parent=1 // pred_fallthru
      _
    // Predicated region
    $region18: #{tpu_custom_call.1} parent=1 // pred_check
      _
    $region19: #{tpu_custom_call.1} parent=1 // pred_check_branch
      %39 = sbr.rel (0) target = $region21
    $region20: #{tpu_custom_call.1} parent=1 // pred_region
      %40 = dma.done [#allocation6], 512
    $region21: #{tpu_custom_call.1} parent=1 // pred_fallthru
      _
    %v41 = vld [vmem:[#allocation2] sm:$0xff]
    %v42 = vld [vmem:[#allocation5] sm:$0xff]
    %v43 = vld [vmem:[#allocation5 + $0x8] sm:$0xff]
    %v44 = vld [vmem:[#allocation5 + $0x10] sm:$0xff]
    %v45 = vld [vmem:[#allocation5 + $0x18] sm:$0xff]
    %v46 = vld [vmem:[%s2] sm:$0x1]
    %v48 = vlaneseq
    %v49 = vshrl.u32 %v48, 7
    %v50 = vsub.s32 0, %v49
    %v51 = vrot.slane %v46, %v50
    %vm53 = vcmask 261120
    %v55 = vsel %vm53, %v41, 0
    %57 = vmatprep.subr.mxu0 0.0
    %58 = vmatpush1.msra.mxu0 %v42
    %59 = vmatprep.subr.mxu0 0.0
    %60 = vmatpush1.msra.mxu0 %v43
    %61 = vmatprep.subr.mxu0 0.0
    %62 = vmatpush1.msra.mxu0 %v44
    %63 = vmatprep.subr.mxu0 0.0
    %64 = vmatpush1.msra.mxu0 %v45
    %65 = vmatprep.subr.mxu0 0.0
    %66 = vmatpush1.msra.mxu0 0.0
    %67 = vmatprep.subr.mxu0 0.0
    %68 = vmatpush1.msra.mxu0 0.0
    %69 = vmatprep.subr.mxu0 0.0
    %70 = vmatpush1.msra.mxu0 0.0
    %71 = vmatprep.subr.mxu0 0.0
    %72 = vmatpush1.msra.mxu0 0.0
    %73 = vmatprep.subr.mxu0 0.0
    %74 = vmatpush1.msra.mxu0 0.0
    %75 = vmatprep.subr.mxu0 0.0
    %76 = vmatpush1.msra.mxu0 0.0
    %77 = vmatprep.subr.mxu0 0.0
    %78 = vmatpush1.msra.mxu0 0.0
    %79 = vmatprep.subr.mxu0 0.0
    %80 = vmatpush1.msra.mxu0 0.0
    %81 = vmatprep.subr.mxu0 0.0
    %82 = vmatpush1.msra.mxu0 0.0
    %83 = vmatprep.subr.mxu0 0.0
    %84 = vmatpush1.msra.mxu0 0.0
    %85 = vmatprep.subr.mxu0 0.0
    %86 = vmatpush1.msra.mxu0 0.0
    %87 = vmatprep.subr.mxu0 0.0
    %88 = vmatpush1.msra.mxu0 0.0
    %89 = vmatprep.subr.mxu0 0.0
    %90 = vmatpush1.msra.mxu0 0.0
    %91 = vmatprep.subr.mxu0 0.0
    %92 = vmatpush1.msra.mxu0 0.0
    %93 = vmatprep.subr.mxu0 0.0
    %94 = vmatpush1.msra.mxu0 0.0
    %95 = vmatprep.subr.mxu0 0.0
    %96 = vmatpush1.msra.mxu0 0.0
    %97 = vmatprep.subr.mxu0 0.0
    %98 = vmatpush1.msra.mxu0 0.0
    %99 = vmatprep.subr.mxu0 0.0
    %100 = vmatpush1.msra.mxu0 0.0
    %101 = vmatprep.subr.mxu0 0.0
    %102 = vmatpush1.msra.mxu0 0.0
    %103 = vmatprep.subr.mxu0 0.0
    %104 = vmatpush1.msra.mxu0 0.0
    %105 = vmatprep.subr.mxu0 0.0
    %106 = vmatpush1.msra.mxu0 0.0
    %107 = vmatprep.subr.mxu0 0.0
    %108 = vmatpush1.msra.mxu0 0.0
    %109 = vmatprep.subr.mxu0 0.0
    %110 = vmatpush1.msra.mxu0 0.0
    %111 = vmatprep.subr.mxu0 0.0
    %112 = vmatpush1.msra.mxu0 0.0
    %113 = vmatprep.subr.mxu0 0.0
    %114 = vmatpush1.msra.mxu0 0.0
    %115 = vmatprep.subr.mxu0 0.0
    %116 = vmatpush1.msra.mxu0 0.0
    %117 = vmatprep.subr.mxu0 0.0
    %118 = vmatpush1.msra.mxu0 0.0
    %119 = vmatprep.subr.mxu0 0.0
    %120 = vmatpush1.msra.mxu0 0.0
    %121 = vmatprep.mubr.f32.mxu0 0.0
    %122 = vmatmul.mubr.f32.gmra.mrb[0].mxu0 %v55
    %v123 = vpop.f32.mrb[0].mxu0
    %v124 = vadd.f32 %v51, %v123
    %v125 = vpop.f32.mrb[0].mxu0
    %126 = vdwg.mxu0
    %vm127 = vcmp.gt.f32.partialorder %v124, 0.0
    %v128 = vsel %vm127, 1, 0
    %v129 = vcvt.s32.f32 %v128
    %130 = vst [vmem:[#allocation7] sm:$0xff] %v129
    // Predicated region
    $region22: #{tpu_custom_call.1} parent=1 // pred_check
      _
    $region23: #{tpu_custom_call.1} parent=1 // pred_check_branch
      %132 = sbr.rel (0) target = $region25
    $region24: #{tpu_custom_call.1} parent=1 // pred_region
      %s134 = ssub.s32 128, 128
      %135 = vsyncadd [#allocation4], %s134
      %s137 = sshll.u32 [#allocation7], 4
      %s138 = int_to_ptr.vmem [resolvable:$true] %s137
      %140 = dma.vmem_to_hbm [thread:$0]  %s138, 128, %s3, [#allocation4]
    $region25: #{tpu_custom_call.1} parent=1 // pred_fallthru
      _
    // Predicated region
    $region26: #{tpu_custom_call.1} parent=1 // pred_check
      _
    $region27: #{tpu_custom_call.1} parent=1 // pred_check_branch
      %142 = sbr.rel (0) target = $region29
    $region28: #{tpu_custom_call.1} parent=1 // pred_region
      %143 = dma.done [#allocation4], 128
    $region29: #{tpu_custom_call.1} parent=1 // pred_fallthru
      _
    %144 = vsyncpa [#allocation3], 1
    %145 = vsyncpa [#allocation6], 1
    %146 = vsyncpa [#allocation4], 1

</llo_original>
